<compile_context>
chip_gen: v7x
topology: tpu7x:2x2x1
jax: 0.10.0
libtpu: 0.0.40
codegen_flags: <defaults>
</compile_context>

<pallas_src>
import functools

import numpy as np
import jax
import jax.numpy as jnp
from jax.experimental import pallas as pl
from jax.experimental.pallas import tpu as pltpu


def adjust_indices(indices, arr_size1, arr_size2):
    """Mirror of the PyTorch adjust_indices (setup-time glue, numpy)."""
    new_rows, new_cols = [], []
    for t in np.asarray(indices).T:
        for i in range(arr_size1):
            for j in range(arr_size2):
                new_rows.append(int(t[0]) * arr_size2 + j)
                new_cols.append(int(t[1]) * arr_size1 + i)
    return np.stack([np.asarray(new_rows), np.asarray(new_cols)], axis=0)


def _round_up(x, m):
    return ((x + m - 1) // m) * m


def _pick_tile(size, cap=1024, min_tiles=1):
    """Largest tile in {128,256,512,1024} that (a) adds no padding beyond the
    mandatory 128-alignment and (b) keeps at least `min_tiles` tiles on the
    axis (v7x megacore wants >=2 tiles on the parallel N axis)."""
    base = _round_up(max(size, 1), 128)
    tile = 128
    for c in (256, 512, 1024):
        if c > cap or c > base:
            break
        if base % c == 0 and base // c >= min_tiles:
            tile = c
    return tile, base


def build_tile_maps(tile_nonzero):
    """tile_nonzero: bool (Nt, Kt) -- which (tk, tn) tiles of W^T are nonzero.

    Returns flattened int32 (kmap, kuse), indexed by j*Kt + k:
      kmap[j,k] = K-tile index whose data should be resident at grid step (j,k).
                  Zero tiles repeat a neighbouring nonzero tile's index so the
                  Pallas pipeline issues NO new DMA for them.
      kuse[j,k] = 1 iff tile (j,k) actually contributes (guards the MXU dot).
    """
    tile_nonzero = np.asarray(tile_nonzero, dtype=bool)
    nt, kt = tile_nonzero.shape
    kmap = np.zeros((nt, kt), np.int32)
    kuse = tile_nonzero.astype(np.int32)
    for j in range(nt):
        nz = np.flatnonzero(tile_nonzero[j])
        if nz.size == 0:
            continue                       # bias-only output block; kmap stays 0
        cur = int(nz[0])                   # pre-point at the first nonzero tile
        for k in range(kt):
            if tile_nonzero[j, k]:
                cur = k
            kmap[j, k] = cur
    return jnp.asarray(kmap.reshape(-1)), jnp.asarray(kuse.reshape(-1))


def _unpool_kernel(kmap_ref, kuse_ref, x_ref, wt_ref, b_ref, o_ref,
                   *, kt, tk, x_resident):
    """One (tb, tn) output tile; reduction over the K grid axis.

    x_ref : (tb, Kp) if x_resident else (tb, tk)   -- bf16/f32, K on lanes
    wt_ref: (tk, tn)                               -- W^T tile, size2 on lanes
    b_ref : (1, tn)  f32 lane-dense bias row
    o_ref : (tb, tn) f32, accumulated in place across the K axis
    """
    j = pl.program_id(1)
    k = pl.program_id(2)

    @pl.when(k == 0)
    def _():
        # Initialize the resident output tile with the (sublane-broadcast) bias.
        o_ref[...] = jnp.zeros(o_ref.shape, o_ref.dtype) + b_ref[...]

    # Skip the dot for all-zero W^T tiles (their DMA is also skipped because
    # the index_map repeats the previous tile's block index).
    use = kuse_ref[j * kt + k] != 0

    @pl.when(use)
    def _():
        if x_resident:
            xk = x_ref[:, pl.ds(pl.multiple_of(k * tk, tk), tk)]
        else:
            xk = x_ref[...]
        o_ref[...] += jnp.dot(xk, wt_ref[...],
                              preferred_element_type=jnp.float32)


def pallas_unpool_matmul(xp, wt_p, b_p, kmap, kuse, *, tb, tn, tk,
                         x_resident=True):
    """Y[Bp, Np] = Xp[Bp, Kp] @ WTp[Kp, Np] + bias, skipping all-zero W^T tiles.

    xp   : (Bp, Kp)  zero-padded input           (bf16 or f32)
    wt_p : (Kp, Np)  zero-padded dense W^T       (bf16 or f32)
    b_p  : (1, Np)   zero-padded f32 bias row
    kmap, kuse : flattened (Np//tn * Kp//tk) int32 tile maps (build_tile_maps)
    """
    Bp, Kp = xp.shape
    Kp2, Np = wt_p.shape
    assert Kp == Kp2 and Bp % tb == 0 and Kp % tk == 0 and Np % tn == 0
    bt, nt, kt = Bp // tb, Np // tn, Kp // tk
    assert kmap.shape == (nt * kt,) and kuse.shape == (nt * kt,)

    kernel = functools.partial(_unpool_kernel, kt=kt, tk=tk,
                               x_resident=x_resident)

    if x_resident:
        # One DMA of X per batch tile; K slices are taken from VMEM in-kernel.
        x_spec = pl.BlockSpec((tb, Kp), lambda b, j, k, km, ku: (b, 0))
    else:
        # Fallback for very large K: X is re-streamed once per N tile.
        x_spec = pl.BlockSpec((tb, tk), lambda b, j, k, km, ku: (b, k))

    wt_spec = pl.BlockSpec((tk, tn), lambda b, j, k, km, ku: (km[j * kt + k], j))
    b_spec = pl.BlockSpec((1, tn), lambda b, j, k, km, ku: (0, j))
    o_spec = pl.BlockSpec((tb, tn), lambda b, j, k, km, ku: (b, j))

    ebytes_x = xp.dtype.itemsize
    ebytes_w = wt_p.dtype.itemsize
    x_blk = tb * (Kp if x_resident else tk) * ebytes_x
    w_blk = tk * tn * ebytes_w
    o_blk = tb * tn * 4
    need = 2 * (x_blk + w_blk + o_blk + tn * 4)
    # Explicit budget: safe on v7x (64 MiB physical), generous on v5e/v6e.
    vmem_limit = int(min(max(need + (8 << 20), 32 << 20), 48 << 20))

    out = pl.pallas_call(
        kernel,
        out_shape=jax.ShapeDtypeStruct((Bp, Np), jnp.float32),
        grid_spec=pltpu.PrefetchScalarGridSpec(
            num_scalar_prefetch=2,
            grid=(bt, nt, kt),
            in_specs=[x_spec, wt_spec, b_spec],
            out_specs=o_spec,
        ),
        compiler_params=pltpu.CompilerParams(
            dimension_semantics=("parallel", "parallel", "arbitrary"),
            vmem_limit_bytes=vmem_limit,
        ),
        cost_estimate=pl.CostEstimate(
            flops=2 * Bp * Np * Kp,
            transcendentals=0,
            bytes_accessed=(Bp * Kp * ebytes_x + bt * Kp * Np * ebytes_w
                            + Np * 4 + Bp * Np * 4),
        ),
    )(kmap, kuse, xp, wt_p, b_p)
    return out


class BayesianSparseUnpooler:
    """JAX/Pallas port.  Parameters initialized exactly as the torch __init__."""

    # Keep X fully VMEM-resident only while a double-buffered (tb, Kp) slab
    # stays comfortably small.
    _X_RESIDENT_BYTES = 4 << 20

    def __init__(self, arr_size1, arr_size2, indices, log_var=0.0, alpha=None,
                 compute_dtype=jnp.bfloat16):
        indices = np.asarray(indices)
        self.indices = adjust_indices(indices, arr_size1, arr_size2)
        self.graph_size1 = int(indices[1].max()) + 1
        self.graph_size2 = int(indices[0].max()) + 1
        self.arr_size1 = arr_size1
        self.arr_size2 = arr_size2
        self.size1 = self.graph_size1 * arr_size1
        self.size2 = self.graph_size2 * arr_size2
        self.nnz_base = indices.shape[1]
        nnz = self.indices.shape[1]
        # Deterministic parameter init (matches torch: zeros / log_var * ones).
        self.weight_mean = jnp.zeros((nnz,), jnp.float32)
        self.weight_log_var = log_var * jnp.ones((nnz,), jnp.float32)
        self.b_mean = jnp.zeros((self.size2,), jnp.float32)
        self.b_log_var = log_var * jnp.ones((self.size2,), jnp.float32)
        self.alpha = 1 if alpha is None else alpha
        # bf16 streaming of X / W^T (f32 accumulate): ~2x fewer HBM bytes on the
        # dominant operand.  Precision trade-off vs the f32 torch reference.
        self.compute_dtype = compute_dtype

        # Base edge -> block position in W^T (one (arr_size1, arr_size2) block).
        self.edge_g1 = jnp.asarray(indices[1], jnp.int32)   # block-row of W^T (K)
        self.edge_g2 = jnp.asarray(indices[0], jnp.int32)   # block-col of W^T (N)

        # Tile selection: no padding beyond 128-alignment; keep >=2 tiles on the
        # parallel N axis when possible (v7x has 2 TensorCores).
        self.tk, self.Kp = _pick_tile(self.size1, cap=1024, min_tiles=1)
        self.tn, self.Np = _pick_tile(self.size2, cap=1024, min_tiles=2)

        # Static block-sparse structure -> which (tk, tn) W^T tiles are nonzero.
        kt, nt = self.Kp // self.tk, self.Np // self.tn
        tile_nz = np.zeros((nt, kt), dtype=bool)
        for e in range(self.nnz_base):
            g2, g1 = int(indices[0, e]), int(indices[1, e])
            k0 = (g1 * arr_size1) // self.tk
            k1 = ((g1 + 1) * arr_size1 - 1) // self.tk
            j0 = (g2 * arr_size2) // self.tn
            j1 = ((g2 + 1) * arr_size2 - 1) // self.tn
            tile_nz[j0:j1 + 1, k0:k1 + 1] = True
        self.kmap, self.kuse = build_tile_maps(tile_nz)
        self.n_nonzero_tiles = int(tile_nz.sum())

    # ---------------- parameter sampling / densification -------------------
    def sample(self, key):
        kw, kb = jax.random.split(key)
        values = (jax.random.normal(kw, self.weight_mean.shape, jnp.float32)
                  * jnp.exp(self.weight_log_var) + self.weight_mean)
        b = (jax.random.normal(kb, self.b_mean.shape, jnp.float32)
             * jnp.exp(self.b_log_var) + self.b_mean)
        return values, b

    def densify_wt(self, values):
        """Dense W^T (size1, size2) via a vectorized block scatter-add (one
        (arr_size1, arr_size2) block per base edge; duplicate edges accumulate,
        matching torch_sparse.spmm's scatter-add)."""
        blocks = values.reshape(self.nnz_base, self.arr_size1, self.arr_size2)
        grid = jnp.zeros((self.graph_size1, self.graph_size2,
                          self.arr_size1, self.arr_size2), values.dtype)
        grid = grid.at[self.edge_g1, self.edge_g2].add(blocks)
        return grid.transpose(0, 2, 1, 3).reshape(self.size1, self.size2)

    def densify_wt_reference(self, values):
        """Element-wise scatter reference (slow on TPU; test / tiny fallback)."""
        rows = jnp.asarray(self.indices[0])          # in [0, size2)
        cols = jnp.asarray(self.indices[1])          # in [0, size1)
        return jnp.zeros((self.size1, self.size2),
                         jnp.float32).at[cols, rows].add(values)

    # ------------------------------ forward --------------------------------
    def _pallas_forward(self, x2d, wt, b):
        B = x2d.shape[0]
        tb = min(256, _round_up(max(B, 1), 8))
        Bp = _round_up(B, tb)
        cdt = self.compute_dtype
        xp = (jnp.zeros((Bp, self.Kp), cdt)
              .at[:B, :self.size1].set(x2d.astype(cdt)))
        wt_p = (jnp.zeros((self.Kp, self.Np), cdt)
                .at[:self.size1, :self.size2].set(wt.astype(cdt)))
        b_p = jnp.zeros((1, self.Np), jnp.float32).at[0, :self.size2].set(b)
        x_resident = (tb * self.Kp * jnp.dtype(cdt).itemsize
                      <= self._X_RESIDENT_BYTES)
        out = pallas_unpool_matmul(xp, wt_p, b_p, self.kmap, self.kuse,
                                   tb=tb, tn=self.tn, tk=self.tk,
                                   x_resident=x_resident)
        return out[:B, :self.size2]

    def __call__(self, x, key, use_pallas=None):
        values, b = self.sample(key)
        x2d = x[..., 0]                               # (B, size1)
        if use_pallas is None:
            # Sub-tile problems: a pallas_call's fixed cost + 128-padding beats
            # nothing here; let XLA handle them.
            use_pallas = self.size1 >= 128 and self.size2 >= 128
        wt = self.densify_wt(values)                  # (size1, size2) f32
        if use_pallas:
            out2d = self._pallas_forward(x2d, wt, b)
        else:
            out2d = x2d @ wt + b[None, :]
        out = out2d[..., None]                        # (B, size2, 1)
        kl = 0.0   # reference code overwrites kl with 0 before returning
        return out, self.alpha * kl


if __name__ == "__main__":
    key = jax.random.PRNGKey(0)
    kx, ks = jax.random.split(key)

    # --- module-level check at small, module-consistent shapes -------------
    arr_size1, arr_size2 = 4, 8
    base_indices = np.array([[0, 1, 2, 1],
                             [0, 2, 1, 3]], dtype=np.int32)      # (2, nnz_base)
    mod = BayesianSparseUnpooler(arr_size1, arr_size2, base_indices, log_var=0.0)
    B = 2
    x = jax.random.normal(kx, (B, mod.size1, 1), dtype=jnp.float32)  # (2, 16, 1)

    # Force the Pallas path even at demo scale so the kernel is exercised.
    out, kl = mod(x, ks, use_pallas=True)
    out = jax.block_until_ready(out)
    assert out.shape == (B, mod.size2, 1)
    assert float(kl) == 0.0

    # Pure-JAX reference with the same sampled values and the same bf16 casts.
    values_ref, b_ref = mod.sample(ks)
    wt_ref = mod.densify_wt_reference(values_ref)     # exact element scatter
    wt_blk = mod.densify_wt(values_ref)               # block construction
    np.testing.assert_allclose(np.asarray(wt_blk), np.asarray(wt_ref),
                               rtol=1e-6, atol=1e-6)
    cdt = mod.compute_dtype
    out_ref = (x[..., 0].astype(cdt).astype(jnp.float32)
               @ wt_ref.astype(cdt).astype(jnp.float32)
               + b_ref[None, :])
    np.testing.assert_allclose(np.asarray(out[..., 0]), np.asarray(out_ref),
                               rtol=1e-3, atol=1e-3)

    # --- direct multi-tile kernel check: N/K grids, zero-tile skipping
    #     (incl. a bias-only output block) and both X-residency modes ---------
    B2, K2, N2 = 4, 300, 260
    tb2, tk2, tn2 = 8, 128, 128
    Kp2, Np2 = _round_up(K2, tk2), _round_up(N2, tn2)             # 384, 384
    Kt2, Nt2 = Kp2 // tk2, Np2 // tn2                              # 3, 3
    kw2, kx2, kb2 = jax.random.split(jax.random.PRNGKey(1), 3)

    tile_nz = np.zeros((Nt2, Kt2), dtype=bool)
    tile_nz[0, 1] = True                           # j=0 : single interior K tile
    tile_nz[1, 0] = True
    tile_nz[1, 2] = True                           # j=1 : first + last K tiles
    # j=2 : all zero -> bias-only output block
    dense = np.asarray(jax.random.normal(kw2, (Kp2, Np2), jnp.float32))
    wt2 = np.zeros((Kp2, Np2), np.float32)
    for jj in range(Nt2):
        for kk in range(Kt2):
            if tile_nz[jj, kk]:
                wt2[kk * tk2:(kk + 1) * tk2, jj * tn2:(jj + 1) * tn2] = \
                    dense[kk * tk2:(kk + 1) * tk2, jj * tn2:(jj + 1) * tn2]
    wt2 = jnp.asarray(wt2)

    x2 = jax.random.normal(kx2, (B2, K2), jnp.float32)
    b2 = jax.random.normal(kb2, (N2,), jnp.float32)

    Bp2 = _round_up(B2, tb2)
    xp2 = (jnp.zeros((Bp2, Kp2), jnp.bfloat16)
           .at[:B2, :K2].set(x2.astype(jnp.bfloat16)))
    wt2_bf = wt2.astype(jnp.bfloat16)
    b2p = jnp.zeros((1, Np2), jnp.float32).at[0, :N2].set(b2)
    kmap2, kuse2 = build_tile_maps(tile_nz)

    want = (x2.astype(jnp.bfloat16).astype(jnp.float32)
            @ wt2[:K2, :N2].astype(jnp.bfloat16).astype(jnp.float32)
            + b2[None, :])

    for resident in (True, False):
        got = pallas_unpool_matmul(xp2, wt2_bf, b2p, kmap2, kuse2,
                                   tb=tb2, tn=tn2, tk=tk2, x_resident=resident)
        got = jax.block_until_ready(got)[:B2, :N2]
        np.testing.assert_allclose(np.asarray(got), np.asarray(want),
                                   rtol=2e-3, atol=2e-3)

    print("KERNEL_OK")
</pallas_src>

<mosaic_0001>
module attributes {stable_mosaic.version = 11 : i64} {
  func.func @_unpool_kernel(%arg0: i32, %arg1: i32, %arg2: i32, %arg3: memref<1xi32, #tpu.memory_space<smem>>, %arg4: memref<1xi32, #tpu.memory_space<smem>>, %arg5: memref<8x128xbf16, #tpu.memory_space<vmem>>, %arg6: memref<128x128xbf16, #tpu.memory_space<vmem>>, %arg7: memref<1x128xf32, #tpu.memory_space<vmem>>, %arg8: memref<8x128xf32, #tpu.memory_space<vmem>>) attributes {dimension_semantics = [#tpu.dimension_semantics<parallel>, #tpu.dimension_semantics<parallel>, #tpu.dimension_semantics<arbitrary>], iteration_bounds = array<i64: 1, 1, 1>, scalar_prefetch = 2 : i64, scratch_operands = 0 : i64, tpu.core_type = #tpu.core_type<tc>, window_params = [{transform_indices = @transform_0, window_bounds = array<i64: 8, 128>}, {transform_indices = @transform_1, window_bounds = array<i64: 128, 128>}, {transform_indices = @transform_2, window_bounds = array<i64: 1, 128>}, {transform_indices = @transform_3, window_bounds = array<i64: 8, 128>}]} {
    %c0_i32 = arith.constant 0 : i32
    %0 = arith.cmpi eq, %arg2, %c0_i32 : i32
    %1 = arith.extui %0 : i1 to i32
    %c0_i32_0 = arith.constant 0 : i32
    %2 = arith.cmpi ne, %1, %c0_i32_0 : i32
    scf.if %2 {
      %cst = arith.constant 0.000000e+00 : f32
      %10 = vector.broadcast %cst : f32 to vector<8x128xf32>
      %c0 = arith.constant 0 : index
      %c0_3 = arith.constant 0 : index
      %11 = vector.load %arg7[%c0, %c0_3] : memref<1x128xf32, #tpu.memory_space<vmem>>, vector<1x128xf32>
      %12 = vector.broadcast %11 : vector<1x128xf32> to vector<8x128xf32>
      %13 = arith.addf %10, %12 : vector<8x128xf32>
      %c0_4 = arith.constant 0 : index
      %c0_5 = arith.constant 0 : index
      %14 = vector.load %arg8[%c0_4, %c0_5] : memref<8x128xf32, #tpu.memory_space<vmem>>, vector<8x128xf32>
      tpu.vector_store %arg8[%c0_4, %c0_5], %13 {strides = array<i32>} : memref<8x128xf32, #tpu.memory_space<vmem>>, vector<8x128xf32>,
    } else {
    }
    %c1_i32 = arith.constant 1 : i32
    %3 = arith.muli %arg1, %c1_i32 : i32
    %4 = arith.addi %3, %arg2 : i32
    %5 = arith.index_cast %4 : i32 to index
    %6 = memref.load %arg4[%5] : memref<1xi32, #tpu.memory_space<smem>>
    %c0_i32_1 = arith.constant 0 : i32
    %7 = arith.cmpi ne, %6, %c0_i32_1 : i32
    %8 = arith.extui %7 : i1 to i32
    %c0_i32_2 = arith.constant 0 : i32
    %9 = arith.cmpi ne, %8, %c0_i32_2 : i32
    scf.if %9 {
      %c128_i32 = arith.constant 128 : i32
      %10 = arith.muli %arg2, %c128_i32 : i32
      %11 = tpu.assume_multiple %10, 128 : i32
      %c0 = arith.constant 0 : index
      %12 = arith.index_cast %11 : i32 to index
      %13 = vector.load %arg5[%c0, %12] : memref<8x128xbf16, #tpu.memory_space<vmem>>, vector<8x128xbf16>
      %c0_3 = arith.constant 0 : index
      %c0_4 = arith.constant 0 : index
      %14 = vector.load %arg8[%c0_3, %c0_4] : memref<8x128xf32, #tpu.memory_space<vmem>>, vector<8x128xf32>
      %c0_5 = arith.constant 0 : index
      %c0_6 = arith.constant 0 : index
      %15 = vector.load %arg6[%c0_5, %c0_6] : memref<128x128xbf16, #tpu.memory_space<vmem>>, vector<128x128xbf16>
      %cst = arith.constant dense<0.000000e+00> : vector<8x128xf32>
      %16 = tpu.matmul %13, %15, %cst {dimension_numbers = #tpu.dot_dimension_numbers<[1], [0], [0], [1], [0, 0, 1, 1], [], []>} : vector<8x128xbf16>, vector<128x128xbf16>, vector<8x128xf32> -> vector<8x128xf32>
      %17 = arith.addf %14, %16 : vector<8x128xf32>
      %c0_7 = arith.constant 0 : index
      %c0_8 = arith.constant 0 : index
      %18 = vector.load %arg8[%c0_7, %c0_8] : memref<8x128xf32, #tpu.memory_space<vmem>>, vector<8x128xf32>
      tpu.vector_store %arg8[%c0_7, %c0_8], %17 {strides = array<i32>} : memref<8x128xf32, #tpu.memory_space<vmem>>, vector<8x128xf32>,
    } else {
    }
    return
  }
  func.func @transform_0(%arg0: i32, %arg1: i32, %arg2: i32, %arg3: memref<1xi32, #tpu.memory_space<smem>>, %arg4: memref<1xi32, #tpu.memory_space<smem>>) -> (i32, i32) {
    %c0_i32 = arith.constant 0 : i32
    %c0_i32_0 = arith.constant 0 : i32
    return %arg0, %c0_i32 : i32, i32
  }
  func.func @transform_1(%arg0: i32, %arg1: i32, %arg2: i32, %arg3: memref<1xi32, #tpu.memory_space<smem>>, %arg4: memref<1xi32, #tpu.memory_space<smem>>) -> (i32, i32) {
    %c1_i32 = arith.constant 1 : i32
    %0 = arith.muli %arg1, %c1_i32 : i32
    %1 = arith.addi %0, %arg2 : i32
    %2 = arith.index_cast %1 : i32 to index
    %3 = memref.load %arg3[%2] : memref<1xi32, #tpu.memory_space<smem>>
    %c0_i32 = arith.constant 0 : i32
    return %3, %arg1 : i32, i32
  }
  func.func @transform_2(%arg0: i32, %arg1: i32, %arg2: i32, %arg3: memref<1xi32, #tpu.memory_space<smem>>, %arg4: memref<1xi32, #tpu.memory_space<smem>>) -> (i32, i32) {
    %c0_i32 = arith.constant 0 : i32
    %c0_i32_0 = arith.constant 0 : i32
    return %c0_i32, %arg1 : i32, i32
  }
  func.func @transform_3(%arg0: i32, %arg1: i32, %arg2: i32, %arg3: memref<1xi32, #tpu.memory_space<smem>>, %arg4: memref<1xi32, #tpu.memory_space<smem>>) -> (i32, i32) {
    %c0_i32 = arith.constant 0 : i32
    return %arg0, %arg1 : i32, i32
  }
}

</mosaic_0001>

<llo_original>
// kernel: tpu_custom_call.1
$region0: #{tpu_custom_call.1}
  #allocation0 [shape = 'u32[]', space=smem, size = 0x4, offset = 0x4, fixed_abs, tag = 'smem constant byte address 0x4 - core index']
  #allocation1 [shape = 'u32[144,128]{1,0:T(1,128)}', space=vmem, size = 0x12000, scoped, tag = 'internal scratch']
  #allocation2 [shape = 's32[1]{0}', space=sflag, size = 0x4, scoped, tag = 'scoped memory for tpu_custom_call.1']
  #allocation3 [shape = 's32[1]{0:T(128)S(6)}', space=smem, size = 0x200, scoped, tag = 'prefetched SMEM operand 0']
  #allocation4 [shape = 's32[1]{0:T(128)S(6)}', space=smem, size = 0x200, scoped, tag = 'prefetched SMEM operand 1']
  %s0 = inlined_call_operand.<no memory space> [shape: s32[1], index: 0, kind: input, shape index: {}]
  %s1 = inlined_call_operand.<no memory space> [shape: s32[1], index: 1, kind: input, shape index: {}]
  %s2 = inlined_call_operand.vmem [shape: bf16[8,128], index: 2, kind: input, shape index: {}]
  %s3 = inlined_call_operand.hbm [shape: bf16[128,128], index: 3, kind: input, shape index: {}]
  %s4 = inlined_call_operand.vmem [shape: f32[1,128], index: 4, kind: input, shape index: {}]
  %s5 = inlined_call_operand.hbm [shape: f32[8,128], index: 5, kind: output, shape index: {}]
  %s6 = sld [smem:[#allocation0]]
  $region34: #{tpu_custom_call.1} parent=0
    _
  %s8 = ssub.s32 1, %s6
  %s9 = scalar_select 0, %s8, %s6
  %10 = sst [smem:[#allocation3]] %s0
  %11 = sst [smem:[#allocation4]] %s1
  $region1: #{tpu_custom_call.1} parent=0
    #allocation5 [shape = 'u8[32768]{0}', space=vmem, size = 0x8000, scoped, tag = 'input window, operand 3, single buffered']
    #allocation6 [shape = 's32[1]{0}', space=sflag, size = 0x4, scoped, tag = 'scoped memory for tpu_custom_call.1']
    #allocation7 [shape = 's32[1]{0}', space=sflag, size = 0x4, scoped, tag = 'scoped memory for tpu_custom_call.1']
    #allocation8 [shape = 'u8[4096]{0}', space=vmem, size = 0x1000, scoped, tag = 'output window, operand 0, single buffered']
    %12 = vsyncpa [#allocation6], 0
    %13 = vsyncpa [#allocation7], 0
    // Predicated region
    $region2: #{tpu_custom_call.1} parent=1 // pred_check
      _
    $region3: #{tpu_custom_call.1} parent=1 // pred_check_branch
      %15 = sbr.rel (0) target = $region5
    $region4: #{tpu_custom_call.1} parent=1 // pred_region
      _
    $region5: #{tpu_custom_call.1} parent=1 // pred_fallthru
      _
    // Predicated region
    $region6: #{tpu_custom_call.1} parent=1 // pred_check
      _
    $region7: #{tpu_custom_call.1} parent=1 // pred_check_branch
      %17 = sbr.rel (0) target = $region9
    $region8: #{tpu_custom_call.1} parent=1 // pred_region
      %s18 = sadd.s32 0, 0
      %s19 = sld [smem:[#allocation3 + %s18]]
      %s20 = smul.u32 16, %s19
      %s22 = ssub.s32 1024, 1024
      %23 = vsyncadd [#allocation6], %s22
      %s24 = smul.addr %s20, 64
      %s25 = scalar_lea.hbm %s3, %s24
      %s26 = sshll.u32 [#allocation5], 4
      %s27 = int_to_ptr.vmem [resolvable:$true] %s26
      %32 = dma.hbm_to_vmem [thread:$0]  %s25, 1024, %s27, [#allocation6], 64, 64, 4
    $region9: #{tpu_custom_call.1} parent=1 // pred_fallthru
      _
    // Predicated region
    $region10: #{tpu_custom_call.1} parent=1 // pred_check
      _
    $region11: #{tpu_custom_call.1} parent=1 // pred_check_branch
      %34 = sbr.rel (0) target = $region13
    $region12: #{tpu_custom_call.1} parent=1 // pred_region
      _
    $region13: #{tpu_custom_call.1} parent=1 // pred_fallthru
      _
    // Predicated region
    $region14: #{tpu_custom_call.1} parent=1 // pred_check
      _
    $region15: #{tpu_custom_call.1} parent=1 // pred_check_branch
      %36 = sbr.rel (0) target = $region17
    $region16: #{tpu_custom_call.1} parent=1 // pred_region
      %37 = dma.done [#allocation6], 1024
    $region17: #{tpu_custom_call.1} parent=1 // pred_fallthru
      _
    %s38 = sadd.s32 0, 0
    %s39 = sld [smem:[#allocation3 + %s38]]
    %s40 = smul.u32 16, %s39
    %p42 = scmp.eq.s32.totalorder 0, 0
    // Predicated region
    $region18: #{tpu_custom_call.1} parent=1 // pred_check
      %p43 = pneg %p42
    $region19: #{tpu_custom_call.1} parent=1 // pred_check_branch
      %45 = sbr.rel (%p43) target = $region21
    $region20: #{tpu_custom_call.1} parent=1 // pred_region
      %v46 = vld [vmem:[%s4] sm:$0x1]
      %v48 = vlaneseq
      %v49 = vshrl.u32 %v48, 7
      %v50 = vsub.s32 0, %v49
      %v51 = vrot.slane %v46, %v50
      %v53 = vadd.f32 %v51, 0.0
      %54 = vst [vmem:[#allocation8] sm:$0xff] %v53
    $region21: #{tpu_custom_call.1} parent=1 // pred_fallthru
      _
    %s55 = sadd.s32 0, 0
    %s56 = sld [smem:[#allocation4 + %s55]]
    %p57 = scmp.ne.s32.totalorder %s56, 0
    // Predicated region
    $region22: #{tpu_custom_call.1} parent=1 // pred_check
      %p58 = pneg %p57
    $region23: #{tpu_custom_call.1} parent=1 // pred_check_branch
      %60 = sbr.rel (%p58) target = $region25
    $region24: #{tpu_custom_call.1} parent=1 // pred_region
      %s61 = smul.u32 0, 128
      %s62 = sshra.s32 %s61, 7
      %s63 = sand.u32 %s61, 127
      %s64 = smul.addr %s62, 4
      %s65 = scalar_lea.vmem %s2, %s64
      %v66 = vld [vmem:[%s65] sm:$0xf]
      %v67 = vld [vmem:[#allocation8] sm:$0xff]
      %v68 = vld [vmem:[#allocation5] sm:$0xf]
      %v69 = vld [vmem:[#allocation5 + $0x4] sm:$0xf]
      %v70 = vld [vmem:[#allocation5 + $0x8] sm:$0xf]
      %v71 = vld [vmem:[#allocation5 + $0xc] sm:$0xf]
      %v72 = vld [vmem:[#allocation5 + $0x10] sm:$0xf]
      %v73 = vld [vmem:[#allocation5 + $0x14] sm:$0xf]
      %v74 = vld [vmem:[#allocation5 + $0x18] sm:$0xf]
      %v75 = vld [vmem:[#allocation5 + $0x1c] sm:$0xf]
      %v76 = vld [vmem:[#allocation5 + $0x20] sm:$0xf]
      %v77 = vld [vmem:[#allocation5 + $0x24] sm:$0xf]
      %v78 = vld [vmem:[#allocation5 + $0x28] sm:$0xf]
      %v79 = vld [vmem:[#allocation5 + $0x2c] sm:$0xf]
      %v80 = vld [vmem:[#allocation5 + $0x30] sm:$0xf]
      %v81 = vld [vmem:[#allocation5 + $0x34] sm:$0xf]
      %v82 = vld [vmem:[#allocation5 + $0x38] sm:$0xf]
      %v83 = vld [vmem:[#allocation5 + $0x3c] sm:$0xf]
      %v100 = vunpack.c.l.b16 %v68
      %v101 = vunpack.c.l.b16 %v69
      %v102 = vunpack.c.l.b16 %v70
      %v103 = vunpack.c.l.b16 %v71
      %v104 = vunpack.c.l.b16 %v72
      %v105 = vunpack.c.l.b16 %v73
      %v106 = vunpack.c.l.b16 %v74
      %v107 = vunpack.c.l.b16 %v75
      %v108 = vunpack.c.l.b16 %v76
      %v109 = vunpack.c.l.b16 %v77
      %v110 = vunpack.c.l.b16 %v78
      %v111 = vunpack.c.l.b16 %v79
      %v112 = vunpack.c.l.b16 %v80
      %v113 = vunpack.c.l.b16 %v81
      %v114 = vunpack.c.l.b16 %v82
      %v115 = vunpack.c.l.b16 %v83
      %v116 = vpack.c.b16 %v101, %v100
      %v117 = vpack.c.b16 %v103, %v102
      %v118 = vpack.c.b16 %v105, %v104
      %v119 = vpack.c.b16 %v107, %v106
      %v120 = vpack.c.b16 %v109, %v108
      %v121 = vpack.c.b16 %v111, %v110
      %v122 = vpack.c.b16 %v113, %v112
      %v123 = vpack.c.b16 %v115, %v114
      %132 = vmatprep.subr.bf16.mxu0 0
      %133 = vmatpush1.bf16.msra.mxu0 %v116
      %134 = vmatprep.subr.bf16.mxu0 0
      %135 = vmatpush1.bf16.msra.mxu0 %v117
      %136 = vmatprep.subr.bf16.mxu0 0
      %137 = vmatpush1.bf16.msra.mxu0 %v118
      %138 = vmatprep.subr.bf16.mxu0 0
      %139 = vmatpush1.bf16.msra.mxu0 %v119
      %140 = vmatprep.subr.bf16.mxu0 0
      %141 = vmatpush1.bf16.msra.mxu0 %v120
      %142 = vmatprep.subr.bf16.mxu0 0
      %143 = vmatpush1.bf16.msra.mxu0 %v121
      %144 = vmatprep.subr.bf16.mxu0 0
      %145 = vmatpush1.bf16.msra.mxu0 %v122
      %146 = vmatprep.subr.bf16.mxu0 0
      %147 = vmatpush1.bf16.msra.mxu0 %v123
      %148 = vmatprep.subr.bf16.mxu0 0
      %149 = vmatpush1.bf16.msra.mxu0 0
      %150 = vmatprep.subr.bf16.mxu0 0
      %151 = vmatpush1.bf16.msra.mxu0 0
      %152 = vmatprep.subr.bf16.mxu0 0
      %153 = vmatpush1.bf16.msra.mxu0 0
      %154 = vmatprep.subr.bf16.mxu0 0
      %155 = vmatpush1.bf16.msra.mxu0 0
      %156 = vmatprep.subr.bf16.mxu0 0
      %157 = vmatpush1.bf16.msra.mxu0 0
      %158 = vmatprep.subr.bf16.mxu0 0
      %159 = vmatpush1.bf16.msra.mxu0 0
      %160 = vmatprep.subr.bf16.mxu0 0
      %161 = vmatpush1.bf16.msra.mxu0 0
      %162 = vmatprep.subr.bf16.mxu0 0
      %163 = vmatpush1.bf16.msra.mxu0 0
      %164 = vmatprep.mubr.bf16.mxu0 0
      %165 = vmatmul.mubr.bf16.gmra.mrb[0].mxu0 %v66
      %v166 = vpop.f32.mrb[0].mxu0
      %v167 = vadd.f32 0.0, %v166
      %v168 = vpop.f32.mrb[0].mxu0
      %v169 = vpop.f32.mrb[0].mxu0
      %v170 = vpop.f32.mrb[0].mxu0
      %171 = vdwg.mxu0
      %v172 = vadd.f32 %v67, %v167
      %173 = vst [vmem:[#allocation8] sm:$0xff] %v172
    $region25: #{tpu_custom_call.1} parent=1 // pred_fallthru
      _
    // Predicated region
    $region26: #{tpu_custom_call.1} parent=1 // pred_check
      _
    $region27: #{tpu_custom_call.1} parent=1 // pred_check_branch
      %175 = sbr.rel (0) target = $region29
    $region28: #{tpu_custom_call.1} parent=1 // pred_region
      %s177 = ssub.s32 128, 128
      %178 = vsyncadd [#allocation7], %s177
      %s180 = sshll.u32 [#allocation8], 4
      %s181 = int_to_ptr.vmem [resolvable:$true] %s180
      %183 = dma.vmem_to_hbm [thread:$0]  %s181, 128, %s5, [#allocation7]
    $region29: #{tpu_custom_call.1} parent=1 // pred_fallthru
      _
    // Predicated region
    $region30: #{tpu_custom_call.1} parent=1 // pred_check
      _
    $region31: #{tpu_custom_call.1} parent=1 // pred_check_branch
      %185 = sbr.rel (0) target = $region33
    $region32: #{tpu_custom_call.1} parent=1 // pred_region
      %186 = dma.done [#allocation7], 128
    $region33: #{tpu_custom_call.1} parent=1 // pred_fallthru
      _
    %187 = vsyncpa [#allocation6], 1
    %188 = vsyncpa [#allocation7], 1

</llo_original>
